<compile_context>
chip_gen: v6e
topology: v6e:2x2x1
jax: 0.10.0
libtpu: 0.0.40
codegen_flags: <defaults>
</compile_context>

<pallas_src>
import functools

import jax
import jax.numpy as jnp
from jax.experimental import pallas as pl
from jax.experimental.pallas import tpu as pltpu


def _int_pow(v, n):
    """v**n for a positive Python int n via exponentiation-by-squaring (VPU)."""
    assert n >= 1
    result = None
    while True:
        if n & 1:
            result = v if result is None else result * v
        n >>= 1
        if n == 0:
            return result
        v = v * v


def _gem_kernel(p_ref, x_ref, o_ref, *, eps, static_p):
    # p_ref: (2,) f32 scalar-prefetch ref in SMEM: [p, 1/p].
    # x_ref: (TM, HW) tile in VMEM (input dtype).
    # o_ref: (TM, 1)  tile in VMEM (input dtype).
    x = x_ref[...]
    xc = jnp.maximum(x, jnp.asarray(eps, x.dtype))      # clamp(min=eps)

    if static_p is None:
        p = p_ref[0]                                    # learnable exponent (f32)
        inv_p = p_ref[1]                                # 1/p hoisted to the wrapper
        # x**p = exp(p * log x).  Transcendentals AND the exponent scale stay in
        # the input dtype (bf16 EUP + bf16 VALU on v6e/v7x): no f32 round-trip
        # on the element-wise hot loop.
        xp = jnp.exp(jnp.log(xc) * p.astype(x.dtype))
    else:
        # Integer-exponent fast path: pure VPU multiply chain, zero EUP work.
        xp = _int_pow(xc, static_p)
        inv_p = 1.0 / float(static_p)

    # Spatial mean accumulated in f32 (block spans the full H*W extent).
    # Partial tail tiles may hold stale VMEM rows -> possible NaN transients;
    # the masked partial store of the (TM, 1) output discards them (benign).
    mean = jnp.mean(xp.astype(jnp.float32), axis=-1, keepdims=True)

    # mean ** (1/p): tiny (TM, 1) column, negligible EUP cost.
    o_ref[...] = jnp.exp(jnp.log(mean) * inv_p).astype(o_ref.dtype)


def _round_up(a, b):
    return (a + b - 1) // b * b


def _round_down(a, b):
    return (a // b) * b


def _tpu_vmem_capacity():
    """(vmem_capacity_bytes, known) — conservative 64 MiB if the query fails."""
    try:
        cap = int(pltpu.get_tpu_info().vmem_capacity_bytes)
        if cap > 0:
            return cap, True
    except Exception:
        pass
    return 64 << 20, False


def _pick_row_tile(nc, hw, in_itemsize, out_itemsize, vmem_cap):
    """Row-tile height and scoped-VMEM limit from a per-generation budget."""
    lane_hw = _round_up(hw, 128)             # VMEM pads the lane axis to 128
    per_row_in = lane_hw * in_itemsize       # one row of the input buffer
    per_row_out = 128 * out_itemsize         # lane-padded (tm, 1) output row
    if vmem_cap >= (100 << 20):              # v5e / v6e: 128 MiB physical VMEM
        tile_budget = 52 << 20               # 2x input + 2x output buffers
        vmem_limit = 64 << 20
    else:                                    # v7x: 64 MiB physical -> stay <~ half
        tile_budget = 26 << 20
        vmem_limit = 30 << 20
    # Sublane-packing multiple: 8 for f32, 16 for bf16, 32 for int8/fp8.
    sub = max(8, 32 // in_itemsize)
    tm = tile_budget // (2 * (per_row_in + per_row_out))
    tm = max(sub, min(32768, _round_down(tm, sub)))
    if tm >= nc:
        tm = nc                              # block == full dim is always legal
    # If even the minimum-height tile exceeds the default budget (huge HW),
    # raise the scoped limit toward what is actually needed (plus slack).
    need = 2 * tm * (per_row_in + per_row_out) + (2 << 20)
    vmem_limit = max(vmem_limit, min(need, vmem_cap - (4 << 20)))
    return tm, int(vmem_limit)


_CORE_PARALLEL_OK = None   # tri-state cache: None (untried) / True / False


def gem_pallas(x, p, eps=1e-6, static_p=None):
    """GeM pooling.

    x: (N, C, H, W) NCHW input.
    p: shape-(1,) learnable exponent (mirrors the PyTorch Parameter).
    static_p: optional positive Python int equal to the value held in `p`;
      selects the VPU multiply-chain fast path (no per-element exp/log).
    Returns (N, C, 1, 1) in x.dtype.
    """
    global _CORE_PARALLEL_OK

    N, C, H, W = x.shape
    NC, HW = N * C, H * W
    x2 = x.reshape(NC, HW)                   # free reshape of contiguous NCHW

    in_itemsize = jnp.dtype(x.dtype).itemsize
    vmem_cap, cap_known = _tpu_vmem_capacity()
    tm, vmem_limit = _pick_row_tile(NC, HW, in_itemsize, in_itemsize, vmem_cap)
    num_tiles = pl.cdiv(NC, tm)

    p_arr = jnp.asarray(p, dtype=jnp.float32).reshape((1,))
    if static_p is not None:
        if int(static_p) < 1:
            raise ValueError("static_p must be a positive integer")
        pv = None
        try:
            pv = float(p_arr[0])             # concrete outside jit
        except Exception:
            pv = None                        # tracer under jit: cannot check here
        if pv is not None and pv != float(static_p):
            raise ValueError(
                f"static_p={static_p} does not match the runtime exponent p={pv}")
    p_and_inv = jnp.concatenate([p_arr, 1.0 / p_arr])   # [p, 1/p] -> SMEM prefetch

    n_trans = 2 * NC if static_p is not None else 2 * NC * HW + 2 * NC
    cost = pl.CostEstimate(
        flops=4 * NC * HW,
        transcendentals=n_trans,
        bytes_accessed=NC * HW * in_itemsize + NC * in_itemsize + 8,
    )

    grid_spec = pltpu.PrefetchScalarGridSpec(
        num_scalar_prefetch=1,               # [p, 1/p] lands in SMEM
        grid=(num_tiles,),
        in_specs=[pl.BlockSpec((tm, HW), lambda i, p_sm: (i, 0))],
        out_specs=pl.BlockSpec((tm, 1), lambda i, p_sm: (i, 0)),
    )
    kernel = functools.partial(_gem_kernel, eps=float(eps), static_p=static_p)
    out_shape = jax.ShapeDtypeStruct((NC, 1), x.dtype)

    # Row tiles are independent.  On 64-MiB-VMEM chips (v7x, 2 TensorCores)
    # request an explicit core split of the row axis — the learnable-p path is
    # EUP-bound on a single core and plain "parallel" measures as a near-no-op.
    # Fall back to PARALLEL if the CORE_PARALLEL lowering is rejected.
    want_core_parallel = (
        cap_known
        and vmem_cap < (100 << 20)
        and _CORE_PARALLEL_OK is not False
        and hasattr(pltpu, "CORE_PARALLEL"))
    semantics_candidates = []
    if want_core_parallel:
        semantics_candidates.append((pltpu.CORE_PARALLEL,))
    semantics_candidates.append((pltpu.PARALLEL,))

    last_err = None
    for sems in semantics_candidates:
        try:
            out = pl.pallas_call(
                kernel,
                out_shape=out_shape,
                grid_spec=grid_spec,
                compiler_params=pltpu.CompilerParams(
                    dimension_semantics=sems,
                    vmem_limit_bytes=vmem_limit,
                ),
                cost_estimate=cost,
            )(p_and_inv, x2)
            if want_core_parallel and sems[0] is pltpu.CORE_PARALLEL:
                _CORE_PARALLEL_OK = True
            return out.reshape(N, C, 1, 1)
        except Exception as e:               # per-generation fallback path
            last_err = e
            if want_core_parallel and sems[0] is pltpu.CORE_PARALLEL:
                _CORE_PARALLEL_OK = False
                continue
            raise
    raise last_err


if __name__ == "__main__":
    key = jax.random.PRNGKey(0)
    N, C, H, W = 2, 4, 16, 16
    x = jax.random.normal(key, (N, C, H, W), dtype=jnp.float32)

    # GeM.__init__(p=3): torch.ones(1) * 3
    p_param = jnp.ones((1,), dtype=jnp.float32) * 3.0
    eps = 1e-6

    def gem_ref(xf, pv, e):
        xf = jnp.maximum(xf.astype(jnp.float32), e)
        return jnp.mean(xf ** pv, axis=(-2, -1), keepdims=True) ** (1.0 / pv)

    # 1) f32 input, runtime (learnable) exponent.
    y = gem_pallas(x, p_param, eps=eps)
    jax.block_until_ready(y)
    ref = gem_ref(x, p_param[0], eps)
    assert y.shape == (N, C, 1, 1)
    assert jnp.allclose(y, ref, rtol=1e-4, atol=1e-5), "f32 mismatch vs reference"

    # 2) f32 input, static integer exponent fast path (VPU multiply chain).
    y_s = gem_pallas(x, p_param, eps=eps, static_p=3)
    jax.block_until_ready(y_s)
    assert jnp.allclose(y_s, ref, rtol=1e-4, atol=1e-5), "static-p mismatch vs reference"

    # 3) bf16 input: element-wise pow entirely in bf16, mean/root in f32.
    xb = x.astype(jnp.bfloat16)
    yb = gem_pallas(xb, p_param, eps=eps)
    jax.block_until_ready(yb)
    refb = gem_ref(xb, p_param[0], eps)
    assert jnp.allclose(yb.astype(jnp.float32), refb, rtol=5e-2, atol=1e-3), \
        "bf16 mismatch vs reference"

    print("KERNEL_OK")
</pallas_src>

<mosaic_0001>
module attributes {stable_mosaic.version = 11 : i64} {
  func.func @_gem_kernel(%arg0: i32, %arg1: memref<2xf32, #tpu.memory_space<smem>>, %arg2: memref<8x256xf32, #tpu.memory_space<vmem>>, %arg3: memref<8x1xf32, #tpu.memory_space<vmem>>) attributes {dimension_semantics = [#tpu.dimension_semantics<parallel>], iteration_bounds = array<i64: 1>, scalar_prefetch = 1 : i64, scratch_operands = 0 : i64, tpu.core_type = #tpu.core_type<tc>, window_params = [{transform_indices = @transform_0, window_bounds = array<i64: 8, 256>}, {transform_indices = @transform_1, window_bounds = array<i64: 8, 1>}]} {
    %c0 = arith.constant 0 : index
    %c0_0 = arith.constant 0 : index
    %0 = vector.load %arg2[%c0, %c0_0] : memref<8x256xf32, #tpu.memory_space<vmem>>, vector<8x256xf32>
    %cst = arith.constant 9.99999997E-7 : f32
    %1 = vector.broadcast %cst : f32 to vector<8x256xf32>
    %2 = arith.maximumf %0, %1 : vector<8x256xf32>
    %c0_1 = arith.constant 0 : index
    %3 = memref.load %arg1[%c0_1] : memref<2xf32, #tpu.memory_space<smem>>
    %c1 = arith.constant 1 : index
    %4 = memref.load %arg1[%c1] : memref<2xf32, #tpu.memory_space<smem>>
    %5 = math.log %2 : vector<8x256xf32>
    %6 = vector.broadcast %3 : f32 to vector<8x256xf32>
    %7 = arith.mulf %5, %6 : vector<8x256xf32>
    %8 = math.exp %7 : vector<8x256xf32>
    %cst_2 = arith.constant dense<0.000000e+00> : vector<8xf32>
    %9 = vector.multi_reduction <add>, %8, %cst_2 [1] : vector<8x256xf32> to vector<8xf32>
    %10 = vector.shape_cast %9 : vector<8xf32> to vector<8x1xf32>
    %cst_3 = arith.constant 2.560000e+02 : f32
    %11 = vector.broadcast %cst_3 : f32 to vector<8x1xf32>
    %12 = arith.divf %10, %11 : vector<8x1xf32>
    %13 = math.log %12 : vector<8x1xf32>
    %14 = vector.broadcast %4 : f32 to vector<8x1xf32>
    %15 = arith.mulf %13, %14 : vector<8x1xf32>
    %16 = math.exp %15 : vector<8x1xf32>
    %c0_4 = arith.constant 0 : index
    %c0_5 = arith.constant 0 : index
    %17 = vector.load %arg3[%c0_4, %c0_5] : memref<8x1xf32, #tpu.memory_space<vmem>>, vector<8x1xf32>
    tpu.vector_store %arg3[%c0_4, %c0_5], %16 {strides = array<i32>} : memref<8x1xf32, #tpu.memory_space<vmem>>, vector<8x1xf32>,
    return
  }
  func.func @transform_0(%arg0: i32, %arg1: memref<2xf32, #tpu.memory_space<smem>>) -> (i32, i32) {
    %c0_i32 = arith.constant 0 : i32
    %c0_i32_0 = arith.constant 0 : i32
    return %arg0, %c0_i32 : i32, i32
  }
  func.func @transform_1(%arg0: i32, %arg1: memref<2xf32, #tpu.memory_space<smem>>) -> (i32, i32) {
    %c0_i32 = arith.constant 0 : i32
    %c0_i32_0 = arith.constant 0 : i32
    return %arg0, %c0_i32 : i32, i32
  }
}

</mosaic_0001>

<llo_original>
// kernel: tpu_custom_call.1
$region0: #{tpu_custom_call.1}
  #allocation0 [shape = 'u32[]', space=smem, size = 0x4, offset = 0x4, fixed_abs, tag = 'smem constant byte address 0x4 - core index']
  #allocation1 [shape = 'u32[144,128]{1,0:T(1,128)}', space=vmem, size = 0x12000, scoped, tag = 'internal scratch']
  #allocation2 [shape = 's32[1]{0}', space=sflag, size = 0x4, scoped, tag = 'scoped memory for tpu_custom_call.1']
  #allocation3 [shape = 'u8[512]{0}', space=smem, size = 0x200, scoped, tag = 'prefetched SMEM operand 0']
  %s0 = inlined_call_operand.hbm [shape: f32[2], index: 0, kind: input, shape index: {}]
  %s1 = inlined_call_operand.hbm [shape: f32[8,256], index: 1, kind: input, shape index: {}]
  %s2 = inlined_call_operand.vmem [shape: f32[8,1], index: 2, kind: output, shape index: {}]
  %s3 = sld [smem:[#allocation0]]
  $region18: #{tpu_custom_call.1} parent=0
    _
  %s5 = ssub.s32 1, %s3
  %s6 = scalar_select 0, %s5, %s3
  %8 = dma.hbm_to_smem %s0, 16, [#allocation3], [#allocation2]
  %9 = dma.done [#allocation2], 16
  %10 = sfence
  $region1: #{tpu_custom_call.1} parent=0
    #allocation4 [shape = 'u8[8192]{0}', space=vmem, size = 0x2000, scoped, tag = 'input window, operand 1, single buffered']
    #allocation5 [shape = 's32[1]{0}', space=sflag, size = 0x4, scoped, tag = 'scoped memory for tpu_custom_call.1']
    %11 = vsyncpa [#allocation5], 0
    // Predicated region
    $region2: #{tpu_custom_call.1} parent=1 // pred_check
      _
    $region3: #{tpu_custom_call.1} parent=1 // pred_check_branch
      %13 = sbr.rel (0) target = $region5
    $region4: #{tpu_custom_call.1} parent=1 // pred_region
      %s15 = ssub.s32 256, 256
      %16 = vsyncadd [#allocation5], %s15
      %s18 = sshll.u32 [#allocation4], 4
      %s19 = int_to_ptr.vmem [resolvable:$true] %s18
      %21 = dma.hbm_to_vmem [thread:$0]  %s1, 256, %s19, [#allocation5]
    $region5: #{tpu_custom_call.1} parent=1 // pred_fallthru
      _
    // Predicated region
    $region6: #{tpu_custom_call.1} parent=1 // pred_check
      _
    $region7: #{tpu_custom_call.1} parent=1 // pred_check_branch
      %23 = sbr.rel (0) target = $region9
    $region8: #{tpu_custom_call.1} parent=1 // pred_region
      %24 = dma.done [#allocation5], 256
    $region9: #{tpu_custom_call.1} parent=1 // pred_fallthru
      _
    %v25 = vld [vmem:[#allocation4] sm:$0xff]
    %v26 = vld [vmem:[#allocation4 + $0x8] sm:$0xff]
    %v27 = vmax.f32 %v25, 1e-06
    %v28 = vmax.f32 %v26, 1e-06
    %s29 = sld [smem:[#allocation3]]
    %s30 = sld [smem:[#allocation3 + $0x1]]
    %v31 = vlog2.pop %v27
    %v32 = vmul.f32 %v31, 0.6931472
    %v33 = vlog2.pop %v28
    %v34 = vmul.f32 %v33, 0.6931472
    %v35 = vstv %s29
    %v36 = vmul.f32 %v32, %v35
    %v37 = vmul.f32 %v34, %v35
    %v38 = vmul.f32 %v36, 1.442695
    %v39 = vpow.pop %v38
    %v40 = vmul.f32 %v37, 1.442695
    %v41 = vpow.pop %v40
    %v42 = vadd.f32 %v39, %v41
    %43 = vadd.xlane.f32.xlu0 %v42
    %v44 = vpop.xlane.xlu0 %43
    %v45 = vrcp.pop 256.0
    %v46 = vmul.f32 %v44, %v45
    %v47 = vlog2.pop %v46
    %v48 = vmul.f32 %v47, 0.6931472
    %v49 = vstv %s30
    %v50 = vmul.f32 %v48, %v49
    %v51 = vmul.f32 %v50, 1.442695
    %v52 = vpow.pop %v51
    %vm53 = vcmask 7168
    %54 = vst.msk [vmem:[%s2] sm:$0xff] %vm53, %v52
    // Predicated region
    $region10: #{tpu_custom_call.1} parent=1 // pred_check
      _
    $region11: #{tpu_custom_call.1} parent=1 // pred_check_branch
      %56 = sbr.rel (0) target = $region13
    $region12: #{tpu_custom_call.1} parent=1 // pred_region
      _
    $region13: #{tpu_custom_call.1} parent=1 // pred_fallthru
      _
    // Predicated region
    $region14: #{tpu_custom_call.1} parent=1 // pred_check
      _
    $region15: #{tpu_custom_call.1} parent=1 // pred_check_branch
      %58 = sbr.rel (0) target = $region17
    $region16: #{tpu_custom_call.1} parent=1 // pred_region
      _
    $region17: #{tpu_custom_call.1} parent=1 // pred_fallthru
      _
    %59 = vsyncpa [#allocation5], 1

</llo_original>
